<compile_context>
chip_gen: v5e
topology: v5e:2x2
jax: 0.10.0
libtpu: 0.0.40
codegen_flags: <defaults>
</compile_context>

<pallas_src>
import jax
import jax.numpy as jnp
from jax.experimental import pallas as pl
from jax.experimental.pallas import tpu as pltpu

_LANES = 128


def _c_dequantize_kernel(img_ref, qt_ref, out_ref):
    # img_ref: (tr, 128) image tile; qt_ref: (1, 128) replicated quant table
    # (two copies of the row-major flattened 8x8 table).  Pure VPU broadcast
    # multiply — HBM-bandwidth bound.
    out_ref[...] = img_ref[...] * qt_ref[...]


def _round_up(x, m):
    return ((x + m - 1) // m) * m


def c_dequantize(image, qt, *, tile_rows=None, donate_image=False):
    """image: [B, N, 8, 8]; qt: [8, 8] -> [B, N, 8, 8] (image * qt)."""
    B, N, H, W = image.shape
    assert (H, W) == (8, 8) and qt.shape == (8, 8)
    dtype = image.dtype
    itemsize = jnp.dtype(dtype).itemsize

    # Minimum sublane tile per dtype: f32 -> 8, bf16 -> 16, int8/fp8 -> 32.
    sub = max(8, 32 // itemsize)

    total = B * N * H * W
    rows = pl.cdiv(total, _LANES)
    pad = rows * _LANES - total  # 0, or 64 iff B*N is odd

    flat = image.reshape(-1)
    if pad:
        flat = jnp.pad(flat, (0, pad))
    img2d = flat.reshape(rows, _LANES)

    # ~2 MiB per block regardless of dtype (4096 f32 rows / 8192 bf16 rows).
    if tile_rows is None:
        tile_rows = max(sub, (2 * 1024 * 1024) // (_LANES * itemsize))

    if rows <= sub:
        # Tiny input: single block equal to the full array dims (always a
        # legal BlockSpec, no padding needed).
        tr = rows
    else:
        tr = min(tile_rows, _round_up(rows, sub))
        # v7x megacore: give the "parallel" grid axis >= 2 steps when the
        # tensor is big enough to split, so both TensorCores participate.
        if pl.cdiv(rows, tr) == 1 and rows >= 2 * sub:
            tr = _round_up(pl.cdiv(rows, 2), sub)

    grid = (pl.cdiv(rows, tr),)

    # Two row-major 8x8 blocks per 128-lane row -> tile flattened qt twice.
    qt128 = jnp.tile(qt.astype(dtype).reshape(-1), 2).reshape(1, _LANES)

    extra = {}
    if donate_image:
        extra["input_output_aliases"] = {0: 0}

    out2d = pl.pallas_call(
        _c_dequantize_kernel,
        out_shape=jax.ShapeDtypeStruct((rows, _LANES), dtype),
        grid_spec=pl.GridSpec(
            grid=grid,
            in_specs=[
                pl.BlockSpec((tr, _LANES), lambda i: (i, 0)),
                pl.BlockSpec((1, _LANES), lambda i: (0, 0)),
            ],
            out_specs=pl.BlockSpec((tr, _LANES), lambda i: (i, 0)),
        ),
        compiler_params=pltpu.CompilerParams(
            dimension_semantics=("parallel",),
        ),
        **extra,
    )(img2d, qt128)

    out = out2d.reshape(-1)
    if pad:
        out = out[:total]  # drop the 64-element lane pad (only when B*N odd)
    return out.reshape(B, N, H, W)


if __name__ == "__main__":
    key = jax.random.PRNGKey(0)
    k1, k2, k3 = jax.random.split(key, 3)

    # Deterministic synthetic chroma quantization table (already scaled by
    # the compression factor), standing in for c_table * factor.
    factor = 1.0
    qt = (jnp.arange(64, dtype=jnp.float32).reshape(8, 8) + 1.0) * factor

    # Case 1: small DiffJPEG-consistent shape, B*N even (no lane pad).
    B, N = 2, 4
    image = jnp.round(jax.random.normal(k1, (B, N, 8, 8), jnp.float32) * 10.0)
    out = jax.block_until_ready(c_dequantize(image, qt))
    assert out.shape == image.shape
    assert jnp.allclose(out, image * qt), "mismatch (even B*N case)"

    # Case 2: B*N odd -> exercises the 64-element lane-pad + trailing slice.
    B, N = 3, 5
    image = jnp.round(jax.random.normal(k2, (B, N, 8, 8), jnp.float32) * 10.0)
    out = jax.block_until_ready(c_dequantize(image, qt))
    assert out.shape == image.shape
    assert jnp.allclose(out, image * qt), "mismatch (odd B*N case)"

    # Case 3: multi-block grid with a partial final block (no tensor pad).
    B, N = 2, 100
    image = jnp.round(jax.random.normal(k3, (B, N, 8, 8), jnp.float32) * 10.0)
    out = jax.block_until_ready(c_dequantize(image, qt))
    assert out.shape == image.shape
    assert jnp.allclose(out, image * qt), "mismatch (multi-block case)"

    print("KERNEL_OK")
</pallas_src>

<mosaic_0001>
module attributes {stable_mosaic.version = 11 : i64} {
  func.func @_c_dequantize_kernel(%arg0: i32, %arg1: memref<4x128xf32, #tpu.memory_space<vmem>>, %arg2: memref<1x128xf32, #tpu.memory_space<vmem>>, %arg3: memref<4x128xf32, #tpu.memory_space<vmem>>) attributes {dimension_semantics = [#tpu.dimension_semantics<parallel>], iteration_bounds = array<i64: 1>, scalar_prefetch = 0 : i64, scratch_operands = 0 : i64, tpu.core_type = #tpu.core_type<tc>, window_params = [{transform_indices = @transform_0, window_bounds = array<i64: 4, 128>}, {pipeline_mode = #tpu.pipeline_mode<synchronous>, transform_indices = @transform_1, window_bounds = array<i64: 1, 128>}, {transform_indices = @transform_2, window_bounds = array<i64: 4, 128>}]} {
    %c0 = arith.constant 0 : index
    %c0_0 = arith.constant 0 : index
    %0 = vector.load %arg1[%c0, %c0_0] : memref<4x128xf32, #tpu.memory_space<vmem>>, vector<4x128xf32>
    %c0_1 = arith.constant 0 : index
    %c0_2 = arith.constant 0 : index
    %1 = vector.load %arg2[%c0_1, %c0_2] : memref<1x128xf32, #tpu.memory_space<vmem>>, vector<1x128xf32>
    %2 = vector.broadcast %1 : vector<1x128xf32> to vector<4x128xf32>
    %3 = arith.mulf %0, %2 : vector<4x128xf32>
    %c0_3 = arith.constant 0 : index
    %c0_4 = arith.constant 0 : index
    %4 = vector.load %arg3[%c0_3, %c0_4] : memref<4x128xf32, #tpu.memory_space<vmem>>, vector<4x128xf32>
    tpu.vector_store %arg3[%c0_3, %c0_4], %3 {strides = array<i32>} : memref<4x128xf32, #tpu.memory_space<vmem>>, vector<4x128xf32>,
    return
  }
  func.func @transform_0(%arg0: i32) -> (i32, i32) {
    %c0_i32 = arith.constant 0 : i32
    %c0_i32_0 = arith.constant 0 : i32
    return %arg0, %c0_i32 : i32, i32
  }
  func.func @transform_1(%arg0: i32) -> (i32, i32) {
    %c0_i32 = arith.constant 0 : i32
    %c0_i32_0 = arith.constant 0 : i32
    %c0_i32_1 = arith.constant 0 : i32
    return %c0_i32, %c0_i32_0 : i32, i32
  }
  func.func @transform_2(%arg0: i32) -> (i32, i32) {
    %c0_i32 = arith.constant 0 : i32
    %c0_i32_0 = arith.constant 0 : i32
    return %arg0, %c0_i32 : i32, i32
  }
}

</mosaic_0001>

<llo_original>
// kernel: tpu_custom_call.1
$region0: #{tpu_custom_call.1}
  #allocation0 [shape = 'u32[]', space=smem, size = 0x4, offset = 0x4, fixed_abs, tag = 'smem constant byte address 0x4 - core index']
  #allocation1 [shape = 'u32[72,128]{1,0:T(1,128)}', space=vmem, size = 0x9000, scoped, tag = 'internal scratch']
  %s0 = inlined_call_operand.hbm [shape: f32[4,128], index: 0, kind: input, shape index: {}]
  %s1 = inlined_call_operand.hbm [shape: f32[1,128], index: 1, kind: input, shape index: {}]
  %s2 = inlined_call_operand.hbm [shape: f32[4,128], index: 2, kind: output, shape index: {}]
  %s3 = sld [smem:[#allocation0]]
  $region26: #{tpu_custom_call.1} parent=0
    _
  %s5 = ssub.s32 1, %s3
  %s6 = scalar_select 0, %s5, %s3
  $region1: #{tpu_custom_call.1} parent=0
    #allocation2 [shape = 'u8[2048]{0}', space=vmem, size = 0x800, scoped, tag = 'input window, operand 0, single buffered']
    #allocation3 [shape = 's32[1]{0}', space=sflag, size = 0x4, scoped, tag = 'scoped memory for tpu_custom_call.1']
    #allocation4 [shape = 's32[1]{0}', space=sflag, size = 0x4, scoped, tag = 'scoped memory for tpu_custom_call.1']
    #allocation5 [shape = 'u8[512]{0}', space=vmem, size = 0x400, scoped, tag = 'input window, operand 1, single buffered']
    #allocation6 [shape = 's32[1]{0}', space=sflag, size = 0x4, scoped, tag = 'scoped memory for tpu_custom_call.1']
    #allocation7 [shape = 'u8[2048]{0}', space=vmem, size = 0x800, scoped, tag = 'output window, operand 0, single buffered']
    %7 = vsyncpa [#allocation3], 0
    %8 = vsyncpa [#allocation6], 0
    %9 = vsyncpa [#allocation4], 0
    // Predicated region
    $region2: #{tpu_custom_call.1} parent=1 // pred_check
      _
    $region3: #{tpu_custom_call.1} parent=1 // pred_check_branch
      %11 = sbr.rel (0) target = $region5
    $region4: #{tpu_custom_call.1} parent=1 // pred_region
      %13 = vsyncadd [#allocation3], 0
      %s15 = sshll.u32 %s0, 4
      %s16 = int_to_ptr.hbm [resolvable:$true] %s15
      %s17 = sshll.u32 [#allocation2], 4
      %s18 = int_to_ptr.vmem [resolvable:$true] %s17
      %20 = dma.hbm_to_vmem [thread:$0]  %s16, 64, %s18, [#allocation3]
    $region5: #{tpu_custom_call.1} parent=1 // pred_fallthru
      _
    // Predicated region
    $region6: #{tpu_custom_call.1} parent=1 // pred_check
      _
    $region7: #{tpu_custom_call.1} parent=1 // pred_check_branch
      %22 = sbr.rel (0) target = $region9
    $region8: #{tpu_custom_call.1} parent=1 // pred_region
      %24 = vsyncadd [#allocation6], 0
      %s26 = sshll.u32 %s1, 4
      %s27 = int_to_ptr.hbm [resolvable:$true] %s26
      %s28 = sshll.u32 [#allocation5], 4
      %s29 = int_to_ptr.vmem [resolvable:$true] %s28
      %31 = dma.hbm_to_vmem [thread:$0]  %s27, 16, %s29, [#allocation6]
    $region9: #{tpu_custom_call.1} parent=1 // pred_fallthru
      _
    // Predicated region
    $region10: #{tpu_custom_call.1} parent=1 // pred_check
      _
    $region11: #{tpu_custom_call.1} parent=1 // pred_check_branch
      %33 = sbr.rel (0) target = $region13
    $region12: #{tpu_custom_call.1} parent=1 // pred_region
      %35 = dma.done [#allocation3], 64
    $region13: #{tpu_custom_call.1} parent=1 // pred_fallthru
      _
    // Predicated region
    $region14: #{tpu_custom_call.1} parent=1 // pred_check
      _
    $region15: #{tpu_custom_call.1} parent=1 // pred_check_branch
      %37 = sbr.rel (0) target = $region17
    $region16: #{tpu_custom_call.1} parent=1 // pred_region
      %39 = dma.done [#allocation6], 16
    $region17: #{tpu_custom_call.1} parent=1 // pred_fallthru
      _
    %v40 = vld [vmem:[#allocation2] sm:$0xf]
    %v41 = vld [vmem:[#allocation5] sm:$0x1]
    %v43 = vperm.slane %v41, 0
    %v45 = vmul.f32 %v40, %v43
    %46 = vst [vmem:[#allocation7] sm:$0xf] %v45
    // Predicated region
    $region18: #{tpu_custom_call.1} parent=1 // pred_check
      _
    $region19: #{tpu_custom_call.1} parent=1 // pred_check_branch
      %48 = sbr.rel (0) target = $region21
    $region20: #{tpu_custom_call.1} parent=1 // pred_region
      %50 = vsyncadd [#allocation4], 0
      %s52 = sshll.u32 [#allocation7], 4
      %s53 = int_to_ptr.vmem [resolvable:$true] %s52
      %s54 = sshll.u32 %s2, 4
      %s55 = int_to_ptr.hbm [resolvable:$true] %s54
      %57 = dma.vmem_to_hbm [thread:$0]  %s53, 64, %s55, [#allocation4]
    $region21: #{tpu_custom_call.1} parent=1 // pred_fallthru
      _
    // Predicated region
    $region22: #{tpu_custom_call.1} parent=1 // pred_check
      _
    $region23: #{tpu_custom_call.1} parent=1 // pred_check_branch
      %59 = sbr.rel (0) target = $region25
    $region24: #{tpu_custom_call.1} parent=1 // pred_region
      %61 = dma.done [#allocation4], 64
    $region25: #{tpu_custom_call.1} parent=1 // pred_fallthru
      _
    %62 = vsyncpa [#allocation3], 1
    %63 = vsyncpa [#allocation6], 1
    %64 = vsyncpa [#allocation4], 1

</llo_original>
